<compile_context>
chip_gen: v7x
topology: tpu7x:2x2x1
jax: 0.10.0
libtpu: 0.0.40
codegen_flags: <defaults>
</compile_context>

<pallas_src>
import jax
import jax.numpy as jnp
from jax.experimental import pallas as pl
from jax.experimental.pallas import tpu as pltpu


# Rows (edges) per grid step.  Multiple of 8 (sublanes).  With double
# buffering of 3 inputs + 1 output and each minor dim lane-padded to 128,
# TILE_E=1024 uses only a few MiB of VMEM -> safe on v5e/v6e/v7x, and large
# enough to amortize the ~0.35 us per-grid-step overhead.
_TILE_E = 1024


def _round_up(x, m):
    return (x + m - 1) // m * m


def _concat_fused_kernel(src_ref, dest_ref, edge_ref, out_ref):
    # Build the [TILE_E, 2*fn + fe] row tile in registers and issue a single
    # store (lane shuffles go to the XLU; only one vst per output tile).
    out_ref[...] = jnp.concatenate(
        [src_ref[...], dest_ref[...], edge_ref[...]], axis=1
    )


def _concat_slab_kernel(src_ref, dest_ref, edge_ref, out_ref):
    # Fallback path (known-good lowering): three slab stores into the output
    # tile.  Only used if the minor-dim concatenate fails to lower.
    fn = src_ref.shape[1]
    fe = edge_ref.shape[1]
    out_ref[:, 0:fn] = src_ref[...]
    out_ref[:, fn:2 * fn] = dest_ref[...]
    out_ref[:, 2 * fn:2 * fn + fe] = edge_ref[...]


def _build_concat_call(e_pad, fn, fe, dtype, tile_e, kernel):
    out_cols = 2 * fn + fe
    grid = (pl.cdiv(e_pad, tile_e),)

    # VMEM estimate: 2 pipeline buffers x (3 inputs + 1 output) x tile, with
    # every minor dim padded to 128 lanes.  Clamp into [16 MiB, 32 MiB] so we
    # keep headroom inside v7x's 64 MiB physical VMEM.
    lane_cols = _round_up(max(out_cols, 128), 128)
    need = 2 * 4 * tile_e * lane_cols * jnp.dtype(dtype).itemsize
    vmem_limit = int(min(max(2 * need, 16 << 20), 32 << 20))

    return pl.pallas_call(
        kernel,
        out_shape=jax.ShapeDtypeStruct((e_pad, out_cols), dtype),
        grid_spec=pltpu.PrefetchScalarGridSpec(
            num_scalar_prefetch=0,
            grid=grid,
            in_specs=[
                pl.BlockSpec((tile_e, fn), lambda i: (i, 0)),
                pl.BlockSpec((tile_e, fn), lambda i: (i, 0)),
                pl.BlockSpec((tile_e, fe), lambda i: (i, 0)),
            ],
            out_specs=pl.BlockSpec((tile_e, out_cols), lambda i: (i, 0)),
        ),
        compiler_params=pltpu.CompilerParams(
            # Each output block is independent -> shard E across both
            # TensorCores on v7x; harmless on single-TC v5e/v6e.
            dimension_semantics=("parallel",),
            vmem_limit_bytes=vmem_limit,
        ),
    )


def edge_model_forward(src, dest, edge_attr, u=None, batch=None, *, tile_e=_TILE_E):
    """Pallas implementation of EdgeModel.forward (concat along feature axis)."""
    e, fn = src.shape
    fe = edge_attr.shape[1]
    dtype = src.dtype

    # Tile must be a multiple of 8 sublanes; shrink for tiny E.
    tile = max(8, min(_round_up(tile_e, 8), _round_up(e, 8)))
    # Ragged tail: pad E up to a tile multiple (OOB on VMEM refs is unchecked,
    # so the grid never indexes past real data), then slice the result back.
    e_pad = _round_up(e, tile)

    def pad_rows(x):
        return x if e_pad == e else jnp.pad(x, ((0, e_pad - e), (0, 0)))

    src_p, dest_p, edge_p = pad_rows(src), pad_rows(dest), pad_rows(edge_attr)

    try:
        out = _build_concat_call(e_pad, fn, fe, dtype, tile, _concat_fused_kernel)(
            src_p, dest_p, edge_p
        )
        jax.block_until_ready(out)
    except Exception:
        # Minor-dim concatenate failed to lower on this toolchain; fall back
        # to the slab-store kernel (same tiling / pipelining, 3 stores/tile).
        out = _build_concat_call(e_pad, fn, fe, dtype, tile, _concat_slab_kernel)(
            src_p, dest_p, edge_p
        )

    return out[:e] if e_pad != e else out


def init_edge_model_params(key, n_node_features, n_edge_features, hiddens, n_targets):
    """Deterministic init of the edge_mlp parameters declared in __init__.

    NOTE: these are NOT used by forward() in the reference module (forward only
    concatenates); they are constructed only to mirror the module's shapes.
    """
    # TODO(synk): edge_mlp is declared but never applied in forward(); if it
    # were, fuse the concat into the first Linear as three partial matmuls
    # (src@W1a + dest@W1b + edge@W1c) in one MXU kernel instead of
    # materializing the [E, 2*fn+fe] intermediate.
    k1, k2 = jax.random.split(key)
    in_dim = 2 * n_node_features + n_edge_features
    return {
        "lin1_w": jax.random.normal(k1, (hiddens, in_dim), jnp.float32) * 0.02,
        "lin1_b": jnp.zeros((hiddens,), jnp.float32),
        "bn_gamma": jnp.ones((hiddens,), jnp.float32),
        "bn_beta": jnp.zeros((hiddens,), jnp.float32),
        "lin2_w": jax.random.normal(k2, (n_targets, hiddens), jnp.float32) * 0.02,
        "lin2_b": jnp.zeros((n_targets,), jnp.float32),
    }


if __name__ == "__main__":
    key = jax.random.PRNGKey(0)
    k_src, k_dst, k_edge, k_params = jax.random.split(key, 4)

    n_node_features = 4
    n_edge_features = 3
    hiddens = 32
    n_targets = 2
    num_edges = 8

    src = jax.random.normal(k_src, (num_edges, n_node_features), jnp.float32)
    dest = jax.random.normal(k_dst, (num_edges, n_node_features), jnp.float32)
    edge_attr = jax.random.normal(k_edge, (num_edges, n_edge_features), jnp.float32)

    # Parameters exist to match the module's __init__ but are unused in forward.
    _params = init_edge_model_params(
        k_params, n_node_features, n_edge_features, hiddens, n_targets
    )

    out = edge_model_forward(src, dest, edge_attr)
    jax.block_until_ready(out)

    ref = jnp.concatenate([src, dest, edge_attr], axis=1)
    assert out.shape == (num_edges, 2 * n_node_features + n_edge_features)
    assert jnp.allclose(out, ref), "Pallas concat mismatch vs reference"

    # Exercise the tiled path (multiple grid steps + ragged last tile).
    e_big = 3 * _TILE_E + 40
    kb1, kb2, kb3 = jax.random.split(jax.random.PRNGKey(1), 3)
    src_b = jax.random.normal(kb1, (e_big, n_node_features), jnp.float32)
    dest_b = jax.random.normal(kb2, (e_big, n_node_features), jnp.float32)
    edge_b = jax.random.normal(kb3, (e_big, n_edge_features), jnp.float32)
    out_b = edge_model_forward(src_b, dest_b, edge_b)
    jax.block_until_ready(out_b)
    ref_b = jnp.concatenate([src_b, dest_b, edge_b], axis=1)
    assert out_b.shape == ref_b.shape
    assert jnp.allclose(out_b, ref_b), "Pallas tiled concat mismatch vs reference"

    print("KERNEL_OK")
</pallas_src>

<mosaic_0001>
module attributes {stable_mosaic.version = 11 : i64} {
  func.func @_concat_fused_kernel(%arg0: i32, %arg1: memref<8x4xf32, #tpu.memory_space<vmem>>, %arg2: memref<8x4xf32, #tpu.memory_space<vmem>>, %arg3: memref<8x3xf32, #tpu.memory_space<vmem>>, %arg4: memref<8x11xf32, #tpu.memory_space<vmem>>) attributes {dimension_semantics = [#tpu.dimension_semantics<parallel>], iteration_bounds = array<i64: 1>, scalar_prefetch = 0 : i64, scratch_operands = 0 : i64, tpu.core_type = #tpu.core_type<tc>, window_params = [{transform_indices = @transform_0, window_bounds = array<i64: 8, 4>}, {transform_indices = @transform_1, window_bounds = array<i64: 8, 4>}, {transform_indices = @transform_2, window_bounds = array<i64: 8, 3>}, {transform_indices = @transform_3, window_bounds = array<i64: 8, 11>}]} {
    %c0 = arith.constant 0 : index
    %c0_0 = arith.constant 0 : index
    %0 = vector.load %arg1[%c0, %c0_0] : memref<8x4xf32, #tpu.memory_space<vmem>>, vector<8x4xf32>
    %c0_1 = arith.constant 0 : index
    %c0_2 = arith.constant 0 : index
    %1 = vector.load %arg2[%c0_1, %c0_2] : memref<8x4xf32, #tpu.memory_space<vmem>>, vector<8x4xf32>
    %c0_3 = arith.constant 0 : index
    %c0_4 = arith.constant 0 : index
    %2 = vector.load %arg3[%c0_3, %c0_4] : memref<8x3xf32, #tpu.memory_space<vmem>>, vector<8x3xf32>
    %3 = tpu.concatenate %0, %1, %2 in 1 : vector<8x4xf32>, vector<8x4xf32>, vector<8x3xf32> -> vector<8x11xf32>
    %c0_5 = arith.constant 0 : index
    %c0_6 = arith.constant 0 : index
    %4 = vector.load %arg4[%c0_5, %c0_6] : memref<8x11xf32, #tpu.memory_space<vmem>>, vector<8x11xf32>
    tpu.vector_store %arg4[%c0_5, %c0_6], %3 {strides = array<i32>} : memref<8x11xf32, #tpu.memory_space<vmem>>, vector<8x11xf32>,
    return
  }
  func.func @transform_0(%arg0: i32) -> (i32, i32) {
    %c0_i32 = arith.constant 0 : i32
    %c0_i32_0 = arith.constant 0 : i32
    return %arg0, %c0_i32 : i32, i32
  }
  func.func @transform_1(%arg0: i32) -> (i32, i32) {
    %c0_i32 = arith.constant 0 : i32
    %c0_i32_0 = arith.constant 0 : i32
    return %arg0, %c0_i32 : i32, i32
  }
  func.func @transform_2(%arg0: i32) -> (i32, i32) {
    %c0_i32 = arith.constant 0 : i32
    %c0_i32_0 = arith.constant 0 : i32
    return %arg0, %c0_i32 : i32, i32
  }
  func.func @transform_3(%arg0: i32) -> (i32, i32) {
    %c0_i32 = arith.constant 0 : i32
    %c0_i32_0 = arith.constant 0 : i32
    return %arg0, %c0_i32 : i32, i32
  }
}

module attributes {stable_mosaic.version = 11 : i64} {
  func.func @_concat_slab_kernel(%arg0: i32, %arg1: memref<8x4xf32, #tpu.memory_space<vmem>>, %arg2: memref<8x4xf32, #tpu.memory_space<vmem>>, %arg3: memref<8x3xf32, #tpu.memory_space<vmem>>, %arg4: memref<8x11xf32, #tpu.memory_space<vmem>>) attributes {dimension_semantics = [#tpu.dimension_semantics<parallel>], iteration_bounds = array<i64: 1>, scalar_prefetch = 0 : i64, scratch_operands = 0 : i64, tpu.core_type = #tpu.core_type<tc>, window_params = [{transform_indices = @transform_0, window_bounds = array<i64: 8, 4>}, {transform_indices = @transform_1, window_bounds = array<i64: 8, 4>}, {transform_indices = @transform_2, window_bounds = array<i64: 8, 3>}, {transform_indices = @transform_3, window_bounds = array<i64: 8, 11>}]} {
    %c0 = arith.constant 0 : index
    %c0_0 = arith.constant 0 : index
    %0 = vector.load %arg1[%c0, %c0_0] : memref<8x4xf32, #tpu.memory_space<vmem>>, vector<8x4xf32>
    %c0_1 = arith.constant 0 : index
    %c0_2 = arith.constant 0 : index
    %1 = vector.load %arg4[%c0_1, %c0_2] : memref<8x11xf32, #tpu.memory_space<vmem>>, vector<8x4xf32>
    tpu.vector_store %arg4[%c0_1, %c0_2], %0 {strides = array<i32>} : memref<8x11xf32, #tpu.memory_space<vmem>>, vector<8x4xf32>,
    %c0_3 = arith.constant 0 : index
    %c0_4 = arith.constant 0 : index
    %2 = vector.load %arg2[%c0_3, %c0_4] : memref<8x4xf32, #tpu.memory_space<vmem>>, vector<8x4xf32>
    %c0_5 = arith.constant 0 : index
    %c4 = arith.constant 4 : index
    %3 = vector.load %arg4[%c0_5, %c4] : memref<8x11xf32, #tpu.memory_space<vmem>>, vector<8x4xf32>
    tpu.vector_store %arg4[%c0_5, %c4], %2 {strides = array<i32>} : memref<8x11xf32, #tpu.memory_space<vmem>>, vector<8x4xf32>,
    %c0_6 = arith.constant 0 : index
    %c0_7 = arith.constant 0 : index
    %4 = vector.load %arg3[%c0_6, %c0_7] : memref<8x3xf32, #tpu.memory_space<vmem>>, vector<8x3xf32>
    %c0_8 = arith.constant 0 : index
    %c8 = arith.constant 8 : index
    %5 = vector.load %arg4[%c0_8, %c8] : memref<8x11xf32, #tpu.memory_space<vmem>>, vector<8x3xf32>
    tpu.vector_store %arg4[%c0_8, %c8], %4 {strides = array<i32>} : memref<8x11xf32, #tpu.memory_space<vmem>>, vector<8x3xf32>,
    return
  }
  func.func @transform_0(%arg0: i32) -> (i32, i32) {
    %c0_i32 = arith.constant 0 : i32
    %c0_i32_0 = arith.constant 0 : i32
    return %arg0, %c0_i32 : i32, i32
  }
  func.func @transform_1(%arg0: i32) -> (i32, i32) {
    %c0_i32 = arith.constant 0 : i32
    %c0_i32_0 = arith.constant 0 : i32
    return %arg0, %c0_i32 : i32, i32
  }
  func.func @transform_2(%arg0: i32) -> (i32, i32) {
    %c0_i32 = arith.constant 0 : i32
    %c0_i32_0 = arith.constant 0 : i32
    return %arg0, %c0_i32 : i32, i32
  }
  func.func @transform_3(%arg0: i32) -> (i32, i32) {
    %c0_i32 = arith.constant 0 : i32
    %c0_i32_0 = arith.constant 0 : i32
    return %arg0, %c0_i32 : i32, i32
  }
}

</mosaic_0001>

<llo_original>
// kernel: tpu_custom_call.1
$region0: #{tpu_custom_call.1}
  #allocation0 [shape = 'u32[]', space=smem, size = 0x4, offset = 0x4, fixed_abs, tag = 'smem constant byte address 0x4 - core index']
  #allocation1 [shape = 'u32[144,128]{1,0:T(1,128)}', space=vmem, size = 0x12000, scoped, tag = 'internal scratch']
  %s0 = inlined_call_operand.vmem [shape: f32[8,4], index: 0, kind: input, shape index: {}]
  %s1 = inlined_call_operand.vmem [shape: f32[8,4], index: 1, kind: input, shape index: {}]
  %s2 = inlined_call_operand.vmem [shape: f32[8,3], index: 2, kind: input, shape index: {}]
  %s3 = inlined_call_operand.hbm [shape: f32[8,11], index: 3, kind: output, shape index: {}]
  %s4 = sld [smem:[#allocation0]]
  $region22: #{tpu_custom_call.1} parent=0
    _
  %s6 = ssub.s32 1, %s4
  %s7 = scalar_select 0, %s6, %s4
  $region1: #{tpu_custom_call.1} parent=0
    #allocation2 [shape = 'u8[4096]{0}', space=vmem, size = 0x1000, scoped, tag = 'output window, operand 0, single buffered']
    #allocation3 [shape = 's32[1]{0}', space=sflag, size = 0x4, scoped, tag = 'scoped memory for tpu_custom_call.1']
    %8 = vsyncpa [#allocation3], 0
    // Predicated region
    $region2: #{tpu_custom_call.1} parent=1 // pred_check
      _
    $region3: #{tpu_custom_call.1} parent=1 // pred_check_branch
      %10 = sbr.rel (0) target = $region5
    $region4: #{tpu_custom_call.1} parent=1 // pred_region
      _
    $region5: #{tpu_custom_call.1} parent=1 // pred_fallthru
      _
    // Predicated region
    $region6: #{tpu_custom_call.1} parent=1 // pred_check
      _
    $region7: #{tpu_custom_call.1} parent=1 // pred_check_branch
      %12 = sbr.rel (0) target = $region9
    $region8: #{tpu_custom_call.1} parent=1 // pred_region
      _
    $region9: #{tpu_custom_call.1} parent=1 // pred_fallthru
      _
    // Predicated region
    $region10: #{tpu_custom_call.1} parent=1 // pred_check
      _
    $region11: #{tpu_custom_call.1} parent=1 // pred_check_branch
      %14 = sbr.rel (0) target = $region13
    $region12: #{tpu_custom_call.1} parent=1 // pred_region
      _
    $region13: #{tpu_custom_call.1} parent=1 // pred_fallthru
      _
    %v15 = vld [vmem:[%s0] sm:$0xff]
    %v16 = vld [vmem:[%s1] sm:$0xff]
    %v17 = vld [vmem:[%s2] sm:$0xff]
    %19 = vrot.lane.b32.xlu0 %v16, 4
    %v20 = vpop.permute.xlu0 %19
    %23 = vrot.lane.b32.xlu0 %v17, 8
    %v24 = vpop.permute.xlu0 %23
    %vm26 = vcmask 31744
    %v27 = vsel %vm26, %v15, %v20
    %vm28 = vcmask 64512
    %v29 = vsel %vm28, %v27, %v24
    %vm30 = vcmask 89088
    %31 = vst.msk [vmem:[#allocation2] sm:$0xff] %vm30, %v29
    // Predicated region
    $region14: #{tpu_custom_call.1} parent=1 // pred_check
      _
    $region15: #{tpu_custom_call.1} parent=1 // pred_check_branch
      %33 = sbr.rel (0) target = $region17
    $region16: #{tpu_custom_call.1} parent=1 // pred_region
      %s35 = ssub.s32 128, 128
      %36 = vsyncadd [#allocation3], %s35
      %s38 = sshll.u32 [#allocation2], 4
      %s39 = int_to_ptr.vmem [resolvable:$true] %s38
      %41 = dma.vmem_to_hbm [thread:$0]  %s39, 128, %s3, [#allocation3]
    $region17: #{tpu_custom_call.1} parent=1 // pred_fallthru
      _
    // Predicated region
    $region18: #{tpu_custom_call.1} parent=1 // pred_check
      _
    $region19: #{tpu_custom_call.1} parent=1 // pred_check_branch
      %43 = sbr.rel (0) target = $region21
    $region20: #{tpu_custom_call.1} parent=1 // pred_region
      %44 = dma.done [#allocation3], 128
    $region21: #{tpu_custom_call.1} parent=1 // pred_fallthru
      _
    %45 = vsyncpa [#allocation3], 1

// kernel: tpu_custom_call.1
$region0: #{tpu_custom_call.1}
  #allocation0 [shape = 'u32[]', space=smem, size = 0x4, offset = 0x4, fixed_abs, tag = 'smem constant byte address 0x4 - core index']
  #allocation1 [shape = 'u32[144,128]{1,0:T(1,128)}', space=vmem, size = 0x12000, scoped, tag = 'internal scratch']
  %s0 = inlined_call_operand.vmem [shape: f32[8,4], index: 0, kind: input, shape index: {}]
  %s1 = inlined_call_operand.vmem [shape: f32[8,4], index: 1, kind: input, shape index: {}]
  %s2 = inlined_call_operand.vmem [shape: f32[8,3], index: 2, kind: input, shape index: {}]
  %s3 = inlined_call_operand.hbm [shape: f32[8,11], index: 3, kind: output, shape index: {}]
  %s4 = sld [smem:[#allocation0]]
  $region22: #{tpu_custom_call.1} parent=0
    _
  %s6 = ssub.s32 1, %s4
  %s7 = scalar_select 0, %s6, %s4
  $region1: #{tpu_custom_call.1} parent=0
    #allocation2 [shape = 'u8[4096]{0}', space=vmem, size = 0x1000, scoped, tag = 'output window, operand 0, single buffered']
    #allocation3 [shape = 's32[1]{0}', space=sflag, size = 0x4, scoped, tag = 'scoped memory for tpu_custom_call.1']
    %8 = vsyncpa [#allocation3], 0
    // Predicated region
    $region2: #{tpu_custom_call.1} parent=1 // pred_check
      _
    $region3: #{tpu_custom_call.1} parent=1 // pred_check_branch
      %10 = sbr.rel (0) target = $region5
    $region4: #{tpu_custom_call.1} parent=1 // pred_region
      _
    $region5: #{tpu_custom_call.1} parent=1 // pred_fallthru
      _
    // Predicated region
    $region6: #{tpu_custom_call.1} parent=1 // pred_check
      _
    $region7: #{tpu_custom_call.1} parent=1 // pred_check_branch
      %12 = sbr.rel (0) target = $region9
    $region8: #{tpu_custom_call.1} parent=1 // pred_region
      _
    $region9: #{tpu_custom_call.1} parent=1 // pred_fallthru
      _
    // Predicated region
    $region10: #{tpu_custom_call.1} parent=1 // pred_check
      _
    $region11: #{tpu_custom_call.1} parent=1 // pred_check_branch
      %14 = sbr.rel (0) target = $region13
    $region12: #{tpu_custom_call.1} parent=1 // pred_region
      _
    $region13: #{tpu_custom_call.1} parent=1 // pred_fallthru
      _
    %v15 = vld [vmem:[%s0] sm:$0xff]
    %vm16 = vcmask 31744
    %17 = vst.msk [vmem:[#allocation2] sm:$0xff] %vm16, %v15
    %v18 = vld [vmem:[%s1] sm:$0xff]
    %20 = vrot.lane.b32.xlu0 %v18, 4
    %v21 = vpop.permute.xlu0 %20
    %vm23 = vcmask 64544
    %24 = vst.msk [vmem:[#allocation2] sm:$0xff] %vm23, %v21
    %v25 = vld [vmem:[%s2] sm:$0xff]
    %27 = vrot.lane.b32.xlu0 %v25, 8
    %v28 = vpop.permute.xlu0 %27
    %vm30 = vcmask 89152
    %31 = vst.msk [vmem:[#allocation2] sm:$0xff] %vm30, %v28
    // Predicated region
    $region14: #{tpu_custom_call.1} parent=1 // pred_check
      _
    $region15: #{tpu_custom_call.1} parent=1 // pred_check_branch
      %33 = sbr.rel (0) target = $region17
    $region16: #{tpu_custom_call.1} parent=1 // pred_region
      %s35 = ssub.s32 128, 128
      %36 = vsyncadd [#allocation3], %s35
      %s38 = sshll.u32 [#allocation2], 4
      %s39 = int_to_ptr.vmem [resolvable:$true] %s38
      %41 = dma.vmem_to_hbm [thread:$0]  %s39, 128, %s3, [#allocation3]
    $region17: #{tpu_custom_call.1} parent=1 // pred_fallthru
      _
    // Predicated region
    $region18: #{tpu_custom_call.1} parent=1 // pred_check
      _
    $region19: #{tpu_custom_call.1} parent=1 // pred_check_branch
      %43 = sbr.rel (0) target = $region21
    $region20: #{tpu_custom_call.1} parent=1 // pred_region
      %44 = dma.done [#allocation3], 128
    $region21: #{tpu_custom_call.1} parent=1 // pred_fallthru
      _
    %45 = vsyncpa [#allocation3], 1

</llo_original>
